<compile_context>
chip_gen: v6e
topology: v6e:2x2x1
jax: 0.10.0
libtpu: 0.0.40
codegen_flags: <defaults>
</compile_context>

<pallas_src>
import functools

import jax
import jax.numpy as jnp
from jax.experimental import pallas as pl
from jax.experimental.pallas import tpu as pltpu

LANE = 128     # TPU vreg lane width
SUBLANE = 8    # f32 sublane count


def _round_up(n, m):
    return ((n + m - 1) // m) * m


def _pad2d(a, rows, cols):
    r, c = a.shape
    return jnp.pad(a, ((0, rows - r), (0, cols - c)))


# ---------------------------------------------------------------------------
# Kernel: 3x (Linear + ReLU), then one fused output-head matmul.
# Column 0 of the fused head -> sigmoid, columns 1..jbin -> softmax,
# remaining padded lanes -> 0.  Output is one lane-dense (tb, 128) slab.
# ---------------------------------------------------------------------------
def mlp_kernel(x_ref, w1_ref, b1_ref, w2_ref, b2_ref, w3_ref, b3_ref,
               wo_ref, bo_ref, out_ref, *, jbin):
    f32 = jnp.float32
    x = x_ref[...]

    h = jnp.dot(x, w1_ref[...], preferred_element_type=f32) + b1_ref[...]
    h = jnp.maximum(h, 0.0)
    h = jnp.dot(h.astype(w2_ref.dtype), w2_ref[...],
                preferred_element_type=f32) + b2_ref[...]
    h = jnp.maximum(h, 0.0)
    h = jnp.dot(h.astype(w3_ref.dtype), w3_ref[...],
                preferred_element_type=f32) + b3_ref[...]
    h = jnp.maximum(h, 0.0)

    # Fused output head: [sigmoid-logit | softmax-logits | zero padding]
    z = jnp.dot(h.astype(wo_ref.dtype), wo_ref[...],
                preferred_element_type=f32) + bo_ref[...]

    lane = jax.lax.broadcasted_iota(jnp.int32, z.shape, dimension=1)
    is_sig = lane == 0
    in_soft = jnp.logical_and(lane >= 1, lane <= jbin)

    # Single fused exp sweep (EUP):
    #   lane 0        -> exp(-z0)          (sigmoid = 1 / (1 + exp(-z0)))
    #   softmax lanes -> exp(z - rowmax)   (max-stabilized)
    #   padded lanes  -> exp(-inf) = 0
    zs = jnp.where(in_soft, z, -jnp.inf)
    zmax = jnp.max(zs, axis=-1, keepdims=True)
    arg = jnp.where(is_sig, jnp.minimum(-z, 80.0), zs - zmax)  # clamp avoids inf
    e = jnp.exp(arg)

    s = jnp.sum(jnp.where(in_soft, e, 0.0), axis=-1, keepdims=True)  # s >= 1
    num = jnp.where(is_sig, 1.0, e)          # padded lanes: e == 0 -> output 0
    den = jnp.where(is_sig, 1.0 + e, s)
    r = pl.reciprocal(den, approx=True)      # EUP vrcp (otherwise-idle slot)
    r = r * (2.0 - den * r)                  # one Newton step -> full f32 accuracy

    out_ref[...] = (num * r).astype(out_ref.dtype)


# ---------------------------------------------------------------------------
# Parameter prep: fuse the two heads and zero-pad lane dims to 128.
# NOTE: w1's contraction dim stays at F (x is never lane-padded).
# ---------------------------------------------------------------------------
def prepare_params(params, dtype=jnp.float32):
    F, H = params["w1"].shape
    jbin = params["wo2"].shape[1]
    Hp = _round_up(H, LANE)              # keep 128 (do NOT pad to 256 on v6e/v7x)
    Op = _round_up(1 + jbin, LANE)

    wo = jnp.concatenate([params["wo1"], params["wo2"]], axis=1)   # [H, 1+jbin]
    bo = jnp.concatenate([params["bo1"], params["bo2"]], axis=1)   # [1, 1+jbin]

    padded = dict(
        w1=_pad2d(params["w1"], F, Hp),  b1=_pad2d(params["b1"], 1, Hp),
        w2=_pad2d(params["w2"], Hp, Hp), b2=_pad2d(params["b2"], 1, Hp),
        w3=_pad2d(params["w3"], Hp, Hp), b3=_pad2d(params["b3"], 1, Hp),
        wo=_pad2d(wo, Hp, Op),           bo=_pad2d(bo, 1, Op),
    )
    padded = jax.tree_util.tree_map(lambda a: a.astype(dtype), padded)
    return padded, (F, Hp, Op, jbin)


def _dense_fallback(x, p, jbin):
    """Plain XLA path for tiny batches (pallas_call launch cost dominates)."""
    h = jax.nn.relu(x @ p["w1"] + p["b1"])
    h = jax.nn.relu(h @ p["w2"] + p["b2"])
    h = jax.nn.relu(h @ p["w3"] + p["b3"])
    z = (h @ p["wo"] + p["bo"]).astype(jnp.float32)
    return jax.nn.sigmoid(z[:, 0:1]), jax.nn.softmax(z[:, 1:1 + jbin], axis=-1)


# ---------------------------------------------------------------------------
# Wrapper: batch-tiled pallas_call; weights resident via constant index_maps.
# ---------------------------------------------------------------------------
def mlp_forward(predicates, padded_params, dims, *, block_b=2048,
                out_dtype=jnp.float32, min_pallas_batch=0):
    F, Hp, Op, jbin = dims
    B = predicates.shape[0]
    assert predicates.shape[1] == F
    p = padded_params
    w_dtype = p["w1"].dtype

    if B < min_pallas_batch:
        return _dense_fallback(predicates.astype(w_dtype), p, jbin)

    # Sublane packing: f32 -> 8 rows, bf16 -> 16 (keeps edge stores unmasked).
    sub = 16 if w_dtype == jnp.bfloat16 else SUBLANE

    # Batch tiling: large tiles to amortize per-step overhead, but always >=2
    # (ideally 4) grid steps when possible so v7x's two TensorCores both work.
    if B >= 2 * block_b:
        tb = block_b
    else:
        steps = 4 if B >= 4 * sub else (2 if B >= 2 * sub else 1)
        tb = min(_round_up(-(-B // steps), sub), block_b)
    Bp = _round_up(B, tb)

    # Only the batch dim is ever padded; the F-lane dim of x stays unpadded.
    x = predicates if Bp == B else jnp.pad(predicates, ((0, Bp - B), (0, 0)))
    x = x.astype(w_dtype)

    const = lambda i: (0, 0)                 # weights/biases stay VMEM-resident
    in_specs = [
        pl.BlockSpec((tb, F), lambda i: (i, 0)),   # x: full (unpadded) feature dim
        pl.BlockSpec((F, Hp), const),  pl.BlockSpec((1, Hp), const),
        pl.BlockSpec((Hp, Hp), const), pl.BlockSpec((1, Hp), const),
        pl.BlockSpec((Hp, Hp), const), pl.BlockSpec((1, Hp), const),
        pl.BlockSpec((Hp, Op), const), pl.BlockSpec((1, Op), const),
    ]
    out_specs = pl.BlockSpec((tb, Op), lambda i: (i, 0))

    # VMEM budget: double-buffered x/out tiles + resident weights, 4x headroom,
    # capped at 48 MiB (leaves room under v7x's 64 MiB physical VMEM).
    isz = jnp.dtype(w_dtype).itemsize
    osz = jnp.dtype(out_dtype).itemsize
    tile_bytes = 2 * (tb * F * isz + tb * Op * osz)
    w_bytes = 2 * (F * Hp + 2 * Hp * Hp + Hp * Op + 3 * Hp + Op) * isz
    vmem_limit = int(min(48 << 20, max(8 << 20, 4 * (tile_bytes + w_bytes))))

    combined = pl.pallas_call(
        functools.partial(mlp_kernel, jbin=jbin),
        out_shape=jax.ShapeDtypeStruct((Bp, Op), out_dtype),
        grid_spec=pltpu.PrefetchScalarGridSpec(
            num_scalar_prefetch=0,
            grid=(Bp // tb,),
            in_specs=in_specs,
            out_specs=out_specs,
        ),
        compiler_params=pltpu.CompilerParams(
            dimension_semantics=("parallel",),
            vmem_limit_bytes=vmem_limit,
        ),
    )(x, p["w1"], p["b1"], p["w2"], p["b2"], p["w3"], p["b3"], p["wo"], p["bo"])

    # TODO(synk): downstream consumers could read the (Bp, 128) slab directly
    # to avoid these two extra XLA slice passes over the output.
    out = combined[:B, 0:1]                # sigmoid head
    dist = combined[:B, 1:1 + jbin]        # softmax head
    return out, dist


# ---------------------------------------------------------------------------
# Init (nn.Linear-style) + pure-JAX reference
# ---------------------------------------------------------------------------
def init_params(key, predicate_feats, hid_units, join_bin_size):
    """Weights stored as [in, out], biases as [1, out] (logical, unpadded)."""
    ks = jax.random.split(key, 10)

    def lin(kw, kb, fan_in, fan_out):
        bound = 1.0 / jnp.sqrt(jnp.float32(fan_in))
        w = jax.random.uniform(kw, (fan_in, fan_out), jnp.float32, -bound, bound)
        b = jax.random.uniform(kb, (1, fan_out), jnp.float32, -bound, bound)
        return w, b

    w1, b1 = lin(ks[0], ks[1], predicate_feats, hid_units)
    w2, b2 = lin(ks[2], ks[3], hid_units, hid_units)
    w3, b3 = lin(ks[4], ks[5], hid_units, hid_units)
    wo1, bo1 = lin(ks[6], ks[7], hid_units, 1)
    wo2, bo2 = lin(ks[8], ks[9], hid_units, join_bin_size)
    return dict(w1=w1, b1=b1, w2=w2, b2=b2, w3=w3, b3=b3,
                wo1=wo1, bo1=bo1, wo2=wo2, bo2=bo2)


def mlp_reference(predicates, p):
    hi = jax.lax.Precision.HIGHEST   # exact f32 matmul for the comparison
    h = jax.nn.relu(jnp.dot(predicates, p["w1"], precision=hi) + p["b1"])
    h = jax.nn.relu(jnp.dot(h, p["w2"], precision=hi) + p["b2"])
    h = jax.nn.relu(jnp.dot(h, p["w3"], precision=hi) + p["b3"])
    out = jax.nn.sigmoid(jnp.dot(h, p["wo1"], precision=hi) + p["bo1"])
    dist = jax.nn.softmax(jnp.dot(h, p["wo2"], precision=hi) + p["bo2"], axis=-1)
    return out, dist


if __name__ == "__main__":
    key = jax.random.PRNGKey(0)
    k_x, k_p = jax.random.split(key)

    B = 100                 # small; non-multiple of tile -> exercises batch padding
    predicate_feats = 32
    hid_units = 32
    join_bin_size = 20

    predicates = jax.random.normal(k_x, (B, predicate_feats), jnp.float32)
    params = init_params(k_p, predicate_feats, hid_units, join_bin_size)

    # f32 keeps the correctness check tight; pass dtype=jnp.bfloat16 for
    # large-batch v5e/v6e/v7x deployments (halves x/weight HBM traffic).
    padded, dims = prepare_params(params, dtype=jnp.float32)

    # min_pallas_batch=0 forces the Pallas path for this small test batch.
    out, dist = mlp_forward(predicates, padded, dims, min_pallas_batch=0)
    out, dist = jax.block_until_ready((out, dist))

    ref_out, ref_dist = mlp_reference(predicates, params)
    assert out.shape == (B, 1) and dist.shape == (B, join_bin_size)
    assert jnp.allclose(out, ref_out, atol=1e-4, rtol=1e-4), \
        float(jnp.max(jnp.abs(out - ref_out)))
    assert jnp.allclose(dist, ref_dist, atol=1e-4, rtol=1e-4), \
        float(jnp.max(jnp.abs(dist - ref_dist)))

    print("KERNEL_OK")
</pallas_src>

<mosaic_0001>
module attributes {stable_mosaic.version = 11 : i64} {
  func.func @mlp_kernel(%arg0: i32, %arg1: memref<32x32xf32, #tpu.memory_space<vmem>>, %arg2: memref<32x128xf32, #tpu.memory_space<vmem>>, %arg3: memref<1x128xf32, #tpu.memory_space<vmem>>, %arg4: memref<128x128xf32, #tpu.memory_space<vmem>>, %arg5: memref<1x128xf32, #tpu.memory_space<vmem>>, %arg6: memref<128x128xf32, #tpu.memory_space<vmem>>, %arg7: memref<1x128xf32, #tpu.memory_space<vmem>>, %arg8: memref<128x128xf32, #tpu.memory_space<vmem>>, %arg9: memref<1x128xf32, #tpu.memory_space<vmem>>, %arg10: memref<32x128xf32, #tpu.memory_space<vmem>>) attributes {dimension_semantics = [#tpu.dimension_semantics<parallel>], iteration_bounds = array<i64: 4>, scalar_prefetch = 0 : i64, scratch_operands = 0 : i64, tpu.core_type = #tpu.core_type<tc>, window_params = [{transform_indices = @transform_0, window_bounds = array<i64: 32, 32>}, {pipeline_mode = #tpu.pipeline_mode<synchronous>, transform_indices = @transform_1, window_bounds = array<i64: 32, 128>}, {pipeline_mode = #tpu.pipeline_mode<synchronous>, transform_indices = @transform_2, window_bounds = array<i64: 1, 128>}, {pipeline_mode = #tpu.pipeline_mode<synchronous>, transform_indices = @transform_3, window_bounds = array<i64: 128, 128>}, {pipeline_mode = #tpu.pipeline_mode<synchronous>, transform_indices = @transform_4, window_bounds = array<i64: 1, 128>}, {pipeline_mode = #tpu.pipeline_mode<synchronous>, transform_indices = @transform_5, window_bounds = array<i64: 128, 128>}, {pipeline_mode = #tpu.pipeline_mode<synchronous>, transform_indices = @transform_6, window_bounds = array<i64: 1, 128>}, {pipeline_mode = #tpu.pipeline_mode<synchronous>, transform_indices = @transform_7, window_bounds = array<i64: 128, 128>}, {pipeline_mode = #tpu.pipeline_mode<synchronous>, transform_indices = @transform_8, window_bounds = array<i64: 1, 128>}, {transform_indices = @transform_9, window_bounds = array<i64: 32, 128>}]} {
    %c0 = arith.constant 0 : index
    %c0_0 = arith.constant 0 : index
    %0 = vector.load %arg1[%c0, %c0_0] : memref<32x32xf32, #tpu.memory_space<vmem>>, vector<32x32xf32>
    %c0_1 = arith.constant 0 : index
    %c0_2 = arith.constant 0 : index
    %1 = vector.load %arg2[%c0_1, %c0_2] : memref<32x128xf32, #tpu.memory_space<vmem>>, vector<32x128xf32>
    %cst = arith.constant dense<0.000000e+00> : vector<32x128xf32>
    %2 = tpu.matmul %0, %1, %cst {dimension_numbers = #tpu.dot_dimension_numbers<[1], [0], [0], [1], [0, 0, 1, 1], [], []>} : vector<32x32xf32>, vector<32x128xf32>, vector<32x128xf32> -> vector<32x128xf32>
    %c0_3 = arith.constant 0 : index
    %c0_4 = arith.constant 0 : index
    %3 = vector.load %arg3[%c0_3, %c0_4] : memref<1x128xf32, #tpu.memory_space<vmem>>, vector<1x128xf32>
    %4 = vector.broadcast %3 : vector<1x128xf32> to vector<32x128xf32>
    %5 = arith.addf %2, %4 : vector<32x128xf32>
    %cst_5 = arith.constant 0.000000e+00 : f32
    %6 = vector.broadcast %cst_5 : f32 to vector<32x128xf32>
    %7 = arith.maximumf %5, %6 : vector<32x128xf32>
    %c0_6 = arith.constant 0 : index
    %c0_7 = arith.constant 0 : index
    %8 = vector.load %arg4[%c0_6, %c0_7] : memref<128x128xf32, #tpu.memory_space<vmem>>, vector<128x128xf32>
    %cst_8 = arith.constant dense<0.000000e+00> : vector<32x128xf32>
    %9 = tpu.matmul %7, %8, %cst_8 {dimension_numbers = #tpu.dot_dimension_numbers<[1], [0], [0], [1], [0, 0, 1, 1], [], []>} : vector<32x128xf32>, vector<128x128xf32>, vector<32x128xf32> -> vector<32x128xf32>
    %c0_9 = arith.constant 0 : index
    %c0_10 = arith.constant 0 : index
    %10 = vector.load %arg5[%c0_9, %c0_10] : memref<1x128xf32, #tpu.memory_space<vmem>>, vector<1x128xf32>
    %11 = vector.broadcast %10 : vector<1x128xf32> to vector<32x128xf32>
    %12 = arith.addf %9, %11 : vector<32x128xf32>
    %cst_11 = arith.constant 0.000000e+00 : f32
    %13 = vector.broadcast %cst_11 : f32 to vector<32x128xf32>
    %14 = arith.maximumf %12, %13 : vector<32x128xf32>
    %c0_12 = arith.constant 0 : index
    %c0_13 = arith.constant 0 : index
    %15 = vector.load %arg6[%c0_12, %c0_13] : memref<128x128xf32, #tpu.memory_space<vmem>>, vector<128x128xf32>
    %cst_14 = arith.constant dense<0.000000e+00> : vector<32x128xf32>
    %16 = tpu.matmul %14, %15, %cst_14 {dimension_numbers = #tpu.dot_dimension_numbers<[1], [0], [0], [1], [0, 0, 1, 1], [], []>} : vector<32x128xf32>, vector<128x128xf32>, vector<32x128xf32> -> vector<32x128xf32>
    %c0_15 = arith.constant 0 : index
    %c0_16 = arith.constant 0 : index
    %17 = vector.load %arg7[%c0_15, %c0_16] : memref<1x128xf32, #tpu.memory_space<vmem>>, vector<1x128xf32>
    %18 = vector.broadcast %17 : vector<1x128xf32> to vector<32x128xf32>
    %19 = arith.addf %16, %18 : vector<32x128xf32>
    %cst_17 = arith.constant 0.000000e+00 : f32
    %20 = vector.broadcast %cst_17 : f32 to vector<32x128xf32>
    %21 = arith.maximumf %19, %20 : vector<32x128xf32>
    %c0_18 = arith.constant 0 : index
    %c0_19 = arith.constant 0 : index
    %22 = vector.load %arg8[%c0_18, %c0_19] : memref<128x128xf32, #tpu.memory_space<vmem>>, vector<128x128xf32>
    %cst_20 = arith.constant dense<0.000000e+00> : vector<32x128xf32>
    %23 = tpu.matmul %21, %22, %cst_20 {dimension_numbers = #tpu.dot_dimension_numbers<[1], [0], [0], [1], [0, 0, 1, 1], [], []>} : vector<32x128xf32>, vector<128x128xf32>, vector<32x128xf32> -> vector<32x128xf32>
    %c0_21 = arith.constant 0 : index
    %c0_22 = arith.constant 0 : index
    %24 = vector.load %arg9[%c0_21, %c0_22] : memref<1x128xf32, #tpu.memory_space<vmem>>, vector<1x128xf32>
    %25 = vector.broadcast %24 : vector<1x128xf32> to vector<32x128xf32>
    %26 = arith.addf %23, %25 : vector<32x128xf32>
    %27 = tpu.iota {dimensions = array<i32: 1>} : vector<32x128xi32>
    %c0_i32 = arith.constant 0 : i32
    %28 = vector.broadcast %c0_i32 : i32 to vector<32x128xi32>
    %29 = arith.cmpi eq, %27, %28 : vector<32x128xi32>
    %c1_i32 = arith.constant 1 : i32
    %30 = vector.broadcast %c1_i32 : i32 to vector<32x128xi32>
    %31 = arith.cmpi sge, %27, %30 : vector<32x128xi32>
    %c20_i32 = arith.constant 20 : i32
    %32 = vector.broadcast %c20_i32 : i32 to vector<32x128xi32>
    %33 = arith.cmpi sle, %27, %32 : vector<32x128xi32>
    %34 = arith.andi %31, %33 : vector<32x128xi1>
    %cst_23 = arith.constant 0xFF800000 : f32
    %35 = vector.broadcast %cst_23 : f32 to vector<32x128xf32>
    %36 = arith.select %34, %26, %35 : vector<32x128xi1>, vector<32x128xf32>
    %cst_24 = arith.constant dense<0xFF800000> : vector<32xf32>
    %37 = vector.multi_reduction <maximumf>, %36, %cst_24 [1] : vector<32x128xf32> to vector<32xf32>
    %38 = vector.shape_cast %37 : vector<32xf32> to vector<32x1xf32>
    %cst_25 = arith.constant 0.000000e+00 : f32
    %39 = vector.broadcast %cst_25 : f32 to vector<32x128xf32>
    %40 = arith.subf %39, %26 : vector<32x128xf32>
    %cst_26 = arith.constant 8.000000e+01 : f32
    %41 = vector.broadcast %cst_26 : f32 to vector<32x128xf32>
    %42 = arith.minimumf %40, %41 : vector<32x128xf32>
    %43 = vector.broadcast %38 : vector<32x1xf32> to vector<32x128xf32>
    %44 = arith.subf %36, %43 : vector<32x128xf32>
    %45 = arith.select %29, %42, %44 : vector<32x128xi1>, vector<32x128xf32>
    %46 = math.exp %45 : vector<32x128xf32>
    %cst_27 = arith.constant 0.000000e+00 : f32
    %47 = vector.broadcast %cst_27 : f32 to vector<32x128xf32>
    %48 = arith.select %34, %46, %47 : vector<32x128xi1>, vector<32x128xf32>
    %cst_28 = arith.constant dense<0.000000e+00> : vector<32xf32>
    %49 = vector.multi_reduction <add>, %48, %cst_28 [1] : vector<32x128xf32> to vector<32xf32>
    %50 = vector.shape_cast %49 : vector<32xf32> to vector<32x1xf32>
    %cst_29 = arith.constant 1.000000e+00 : f32
    %51 = vector.broadcast %cst_29 : f32 to vector<32x128xf32>
    %52 = arith.select %29, %51, %46 : vector<32x128xi1>, vector<32x128xf32>
    %cst_30 = arith.constant 1.000000e+00 : f32
    %53 = vector.broadcast %cst_30 : f32 to vector<32x128xf32>
    %54 = arith.addf %53, %46 : vector<32x128xf32>
    %55 = vector.shape_cast %50 : vector<32x1xf32> to vector<32x1xf32>
    %56 = vector.broadcast %55 : vector<32x1xf32> to vector<32x128xf32>
    %57 = arith.select %29, %54, %56 : vector<32x128xi1>, vector<32x128xf32>
    %58 = tpu.reciprocal %57 {approx = true} : vector<32x128xf32> -> vector<32x128xf32>
    %59 = arith.mulf %57, %58 : vector<32x128xf32>
    %cst_31 = arith.constant 2.000000e+00 : f32
    %60 = vector.broadcast %cst_31 : f32 to vector<32x128xf32>
    %61 = arith.subf %60, %59 : vector<32x128xf32>
    %62 = arith.mulf %58, %61 : vector<32x128xf32>
    %63 = arith.mulf %52, %62 : vector<32x128xf32>
    %c0_32 = arith.constant 0 : index
    %c0_33 = arith.constant 0 : index
    %64 = vector.load %arg10[%c0_32, %c0_33] : memref<32x128xf32, #tpu.memory_space<vmem>>, vector<32x128xf32>
    tpu.vector_store %arg10[%c0_32, %c0_33], %63 {strides = array<i32>} : memref<32x128xf32, #tpu.memory_space<vmem>>, vector<32x128xf32>,
    return
  }
  func.func @transform_0(%arg0: i32) -> (i32, i32) {
    %c0_i32 = arith.constant 0 : i32
    %c0_i32_0 = arith.constant 0 : i32
    return %arg0, %c0_i32 : i32, i32
  }
  func.func @transform_1(%arg0: i32) -> (i32, i32) {
    %c0_i32 = arith.constant 0 : i32
    %c0_i32_0 = arith.constant 0 : i32
    %c0_i32_1 = arith.constant 0 : i32
    return %c0_i32, %c0_i32_0 : i32, i32
  }
  func.func @transform_2(%arg0: i32) -> (i32, i32) {
    %c0_i32 = arith.constant 0 : i32
    %c0_i32_0 = arith.constant 0 : i32
    %c0_i32_1 = arith.constant 0 : i32
    return %c0_i32, %c0_i32_0 : i32, i32
  }
  func.func @transform_3(%arg0: i32) -> (i32, i32) {
    %c0_i32 = arith.constant 0 : i32
    %c0_i32_0 = arith.constant 0 : i32
    %c0_i32_1 = arith.constant 0 : i32
    return %c0_i32, %c0_i32_0 : i32, i32
  }
  func.func @transform_4(%arg0: i32) -> (i32, i32) {
    %c0_i32 = arith.constant 0 : i32
    %c0_i32_0 = arith.constant 0 : i32
    %c0_i32_1 = arith.constant 0 : i32
    return %c0_i32, %c0_i32_0 : i32, i32
  }
  func.func @transform_5(%arg0: i32) -> (i32, i32) {
    %c0_i32 = arith.constant 0 : i32
    %c0_i32_0 = arith.constant 0 : i32
    %c0_i32_1 = arith.constant 0 : i32
    return %c0_i32, %c0_i32_0 : i32, i32
  }
  func.func @transform_6(%arg0: i32) -> (i32, i32) {
    %c0_i32 = arith.constant 0 : i32
    %c0_i32_0 = arith.constant 0 : i32
    %c0_i32_1 = arith.constant 0 : i32
    return %c0_i32, %c0_i32_0 : i32, i32
  }
  func.func @transform_7(%arg0: i32) -> (i32, i32) {
    %c0_i32 = arith.constant 0 : i32
    %c0_i32_0 = arith.constant 0 : i32
    %c0_i32_1 = arith.constant 0 : i32
    return %c0_i32, %c0_i32_0 : i32, i32
  }
  func.func @transform_8(%arg0: i32) -> (i32, i32) {
    %c0_i32 = arith.constant 0 : i32
    %c0_i32_0 = arith.constant 0 : i32
    %c0_i32_1 = arith.constant 0 : i32
    return %c0_i32, %c0_i32_0 : i32, i32
  }
  func.func @transform_9(%arg0: i32) -> (i32, i32) {
    %c0_i32 = arith.constant 0 : i32
    %c0_i32_0 = arith.constant 0 : i32
    return %arg0, %c0_i32 : i32, i32
  }
}

</mosaic_0001>

<llo_original>
// kernel: tpu_custom_call.1
$region0: #{tpu_custom_call.1}
  #allocation0 [shape = 'u32[]', space=smem, size = 0x4, offset = 0x4, fixed_abs, tag = 'smem constant byte address 0x4 - core index']
  #allocation1 [shape = 'u32[144,128]{1,0:T(1,128)}', space=vmem, size = 0x12000, scoped, tag = 'internal scratch']
  %s0 = inlined_call_operand.vmem [shape: f32[128,32], index: 0, kind: input, shape index: {}]
  %s1 = inlined_call_operand.vmem [shape: f32[32,128], index: 1, kind: input, shape index: {}]
  %s2 = inlined_call_operand.vmem [shape: f32[1,128], index: 2, kind: input, shape index: {}]
  %s3 = inlined_call_operand.vmem [shape: f32[128,128], index: 3, kind: input, shape index: {}]
  %s4 = inlined_call_operand.vmem [shape: f32[1,128], index: 4, kind: input, shape index: {}]
  %s5 = inlined_call_operand.hbm [shape: f32[128,128], index: 5, kind: input, shape index: {}]
  %s6 = inlined_call_operand.vmem [shape: f32[1,128], index: 6, kind: input, shape index: {}]
  %s7 = inlined_call_operand.hbm [shape: f32[128,128], index: 7, kind: input, shape index: {}]
  %s8 = inlined_call_operand.vmem [shape: f32[1,128], index: 8, kind: input, shape index: {}]
  %s9 = inlined_call_operand.hbm [shape: f32[128,128], index: 9, kind: output, shape index: {}]
  %s10 = sld [smem:[#allocation0]]
  $region77: #{tpu_custom_call.1} parent=0
    _
  %s12 = ssub.s32 1, %s10
  %s13 = scalar_select 0, %s12, %s10
  $region1: #{tpu_custom_call.1} parent=0
    #allocation2 [shape = 'u8[65536]{0}', space=vmem, size = 0x10000, scoped, tag = 'input window, operand 5, single buffered']
    #allocation3 [shape = 's32[2]{0}', space=sflag, size = 0x8, scoped, tag = 'scoped memory for tpu_custom_call.1']
    #allocation4 [shape = 's32[2]{0}', space=sflag, size = 0x8, scoped, tag = 'scoped memory for tpu_custom_call.1']
    #allocation5 [shape = 'u8[65536]{0}', space=vmem, size = 0x10000, scoped, tag = 'input window, operand 7, single buffered']
    #allocation6 [shape = 's32[1]{0}', space=sflag, size = 0x4, scoped, tag = 'scoped memory for tpu_custom_call.1']
    #allocation7 [shape = 'u8[32768]{0}', space=vmem, size = 0x8000, scoped, tag = 'output window, operand 0']
    %14 = vsyncpa [#allocation3], 0
    %15 = vsyncpa [#allocation6], 0
    %16 = vsyncpa [#allocation4], 0
    %s17 = scalar_lea.sflag [#allocation4], 1
    %18 = vsyncpa %s17, 0
    loop: start=0, step=1, limit=6
    $region2: #{tpu_custom_call.1} parent=1 // loop_pre_header
      _
    $region3: #{tpu_custom_call.1} parent=1 // loop_header
      %s20 = sphi 0, %s24
      %p21 = scmp.ge.s32.totalorder %s20, 6
      %s30 = sphi 0, %s32
      %s33 = sphi 0, %s30
      %s34 = sphi 0, %s33
      %s50 = sphi 0, %s34
      %s54 = sphi 0, %s54
      %s56 = sphi 0, %s54
      %s57 = sphi 0, %s56
      %s71 = sphi 0, %s57
      %s75 = sphi 0, %s75
      %s77 = sphi 0, %s75
      %s78 = sphi 0, %s77
      %s92 = sphi 0, %s78
      %s96 = sphi 0, %s96
      %s98 = sphi 0, %s96
      %s99 = sphi 0, %s98
      %s113 = sphi 0, %s99
      %s117 = sphi 0, %s117
      %s119 = sphi 0, %s117
      %s120 = sphi 0, %s119
      %s134 = sphi 0, %s120
      %s138 = sphi 0, %s138
      %s140 = sphi 0, %s138
      %s141 = sphi 0, %s140
      %s155 = sphi 0, %s141
      %s159 = sphi 0, %s159
      %s161 = sphi 0, %s159
      %s162 = sphi 0, %s161
      %s176 = sphi 0, %s162
      %s180 = sphi 0, %s180
      %s182 = sphi 0, %s180
      %s183 = sphi 0, %s182
      %s197 = sphi 0, %s183
      %s201 = sphi 0, %s201
      %s203 = sphi 0, %s201
      %s204 = sphi 0, %s203
      %s218 = sphi 0, %s204
      %s224 = sphi 0, %s226
      %s227 = sphi 0, %s224
      %s228 = sphi 0, %s227
      %s244 = sphi 0, %s228
    $region4: #{tpu_custom_call.1} parent=1 // loop_header_branch
      %23 = sbr.rel (%p21) target = $region8
    $region5: #{tpu_custom_call.1} parent=1 // loop_body
      %s25 = ssub.s32 %s20, 1
      %s26 = ssub.s32 %s20, 2
      %s27 = sadd.s32 %s20, 1
      %s28 = ssub.s32 %s20, %s27
      %p29 = scmp.eq.s32.totalorder %s28, 0
      %s31 = sadd.s32 %s30, 1
      %s32 = scalar_select %p29, %s30, %s31
      %p35 = pneg %p29
      %p36 = scmp.eq.s32.totalorder %s20, 3
      %p37 = por %p35, %p36
      %p38 = scmp.ne.s32.totalorder %s30, %s33
      %p39 = scmp.eq.s32.totalorder %s20, 0
      %p40 = por %p38, %p39
      %p41 = scmp.ne.s32.totalorder %s30, %s33
      %p42 = scmp.eq.s32.totalorder %s25, 3
      %p43 = por %p41, %p42
      %p44 = scmp.ne.s32.totalorder %s33, %s34
      %p45 = scmp.eq.s32.totalorder %s25, 0
      %p46 = por %p44, %p45
      %p47 = scmp.ne.s32.totalorder %s33, %s34
      %p48 = scmp.eq.s32.totalorder %s26, 3
      %p49 = por %p47, %p48
      %p51 = scmp.ne.s32.totalorder %s34, %s50
      %p52 = scmp.eq.s32.totalorder %s26, 0
      %p53 = por %p51, %p52
      %s55 = sadd.s32 %s54, 1
      %p58 = scmp.eq.s32.totalorder %s20, 3
      %p59 = scmp.ne.s32.totalorder %s54, %s56
      %p60 = scmp.eq.s32.totalorder %s20, 0
      %p61 = por %p59, %p60
      %p62 = scmp.ne.s32.totalorder %s54, %s56
      %p63 = scmp.eq.s32.totalorder %s25, 3
      %p64 = por %p62, %p63
      %p65 = scmp.ne.s32.totalorder %s56, %s57
      %p66 = scmp.eq.s32.totalorder %s25, 0
      %p67 = por %p65, %p66
      %p68 = scmp.ne.s32.totalorder %s56, %s57
      %p69 = scmp.eq.s32.totalorder %s26, 3
      %p70 = por %p68, %p69
      %p72 = scmp.ne.s32.totalorder %s57, %s71
      %p73 = scmp.eq.s32.totalorder %s26, 0
      %p74 = por %p72, %p73
      %s76 = sadd.s32 %s75, 1
      %p79 = scmp.eq.s32.totalorder %s20, 3
      %p80 = scmp.ne.s32.totalorder %s75, %s77
      %p81 = scmp.eq.s32.totalorder %s20, 0
      %p82 = por %p80, %p81
      %p83 = scmp.ne.s32.totalorder %s75, %s77
      %p84 = scmp.eq.s32.totalorder %s25, 3
      %p85 = por %p83, %p84
      %p86 = scmp.ne.s32.totalorder %s77, %s78
      %p87 = scmp.eq.s32.totalorder %s25, 0
      %p88 = por %p86, %p87
      %p89 = scmp.ne.s32.totalorder %s77, %s78
      %p90 = scmp.eq.s32.totalorder %s26, 3
      %p91 = por %p89, %p90
      %p93 = scmp.ne.s32.totalorder %s78, %s92
      %p94 = scmp.eq.s32.totalorder %s26, 0
      %p95 = por %p93, %p94
      %s97 = sadd.s32 %s96, 1
      %p100 = scmp.eq.s32.totalorder %s20, 3
      %p101 = scmp.ne.s32.totalorder %s96, %s98
      %p102 = scmp.eq.s32.totalorder %s20, 0
      %p103 = por %p101, %p102
      %p104 = scmp.ne.s32.totalorder %s96, %s98
      %p105 = scmp.eq.s32.totalorder %s25, 3
      %p106 = por %p104, %p105
      %p107 = scmp.ne.s32.totalorder %s98, %s99
      %p108 = scmp.eq.s32.totalorder %s25, 0
      %p109 = por %p107, %p108
      %p110 = scmp.ne.s32.totalorder %s98, %s99
      %p111 = scmp.eq.s32.totalorder %s26, 3
      %p112 = por %p110, %p111
      %p114 = scmp.ne.s32.totalorder %s99, %s113
      %p115 = scmp.eq.s32.totalorder %s26, 0
      %p116 = por %p114, %p115
      %s118 = sadd.s32 %s117, 1
      %p121 = scmp.eq.s32.totalorder %s20, 3
      %p122 = scmp.ne.s32.totalorder %s117, %s119
      %p123 = scmp.eq.s32.totalorder %s20, 0
      %p124 = por %p122, %p123
      %p125 = scmp.ne.s32.totalorder %s117, %s119
      %p126 = scmp.eq.s32.totalorder %s25, 3
      %p127 = por %p125, %p126
      %p128 = scmp.ne.s32.totalorder %s119, %s120
      %p129 = scmp.eq.s32.totalorder %s25, 0
      %p130 = por %p128, %p129
      %p131 = scmp.ne.s32.totalorder %s119, %s120
      %p132 = scmp.eq.s32.totalorder %s26, 3
      %p133 = por %p131, %p132
      %p135 = scmp.ne.s32.totalorder %s120, %s134
      %p136 = scmp.eq.s32.totalorder %s26, 0
      %p137 = por %p135, %p136
      %s139 = sadd.s32 %s138, 1
      %p142 = scmp.eq.s32.totalorder %s20, 3
      %p143 = scmp.ne.s32.totalorder %s138, %s140
      %p144 = scmp.eq.s32.totalorder %s20, 0
      %p145 = por %p143, %p144
      %p146 = scmp.ne.s32.totalorder %s138, %s140
      %p147 = scmp.eq.s32.totalorder %s25, 3
      %p148 = por %p146, %p147
      %p149 = scmp.ne.s32.totalorder %s140, %s141
      %p150 = scmp.eq.s32.totalorder %s25, 0
      %p151 = por %p149, %p150
      %p152 = scmp.ne.s32.totalorder %s140, %s141
      %p153 = scmp.eq.s32.totalorder %s26, 3
      %p154 = por %p152, %p153
      %p156 = scmp.ne.s32.totalorder %s141, %s155
      %p157 = scmp.eq.s32.totalorder %s26, 0
      %p158 = por %p156, %p157
      %s160 = sadd.s32 %s159, 1
      %p163 = scmp.eq.s32.totalorder %s20, 3
      %p164 = scmp.ne.s32.totalorder %s159, %s161
      %p165 = scmp.eq.s32.totalorder %s20, 0
      %p166 = por %p164, %p165
      %p167 = scmp.ne.s32.totalorder %s159, %s161
      %p168 = scmp.eq.s32.totalorder %s25, 3
      %p169 = por %p167, %p168
      %p170 = scmp.ne.s32.totalorder %s161, %s162
      %p171 = scmp.eq.s32.totalorder %s25, 0
      %p172 = por %p170, %p171
      %p173 = scmp.ne.s32.totalorder %s161, %s162
      %p174 = scmp.eq.s32.totalorder %s26, 3
      %p175 = por %p173, %p174
      %p177 = scmp.ne.s32.totalorder %s162, %s176
      %p178 = scmp.eq.s32.totalorder %s26, 0
      %p179 = por %p177, %p178
      %s181 = sadd.s32 %s180, 1
      %p184 = scmp.eq.s32.totalorder %s20, 3
      %p185 = scmp.ne.s32.totalorder %s180, %s182
      %p186 = scmp.eq.s32.totalorder %s20, 0
      %p187 = por %p185, %p186
      %p188 = scmp.ne.s32.totalorder %s180, %s182
      %p189 = scmp.eq.s32.totalorder %s25, 3
      %p190 = por %p188, %p189
      %p191 = scmp.ne.s32.totalorder %s182, %s183
      %p192 = scmp.eq.s32.totalorder %s25, 0
      %p193 = por %p191, %p192
      %p194 = scmp.ne.s32.totalorder %s182, %s183
      %p195 = scmp.eq.s32.totalorder %s26, 3
      %p196 = por %p194, %p195
      %p198 = scmp.ne.s32.totalorder %s183, %s197
      %p199 = scmp.eq.s32.totalorder %s26, 0
      %p200 = por %p198, %p199
      %s202 = sadd.s32 %s201, 1
      %p205 = scmp.eq.s32.totalorder %s20, 3
      %p206 = scmp.ne.s32.totalorder %s201, %s203
      %p207 = scmp.eq.s32.totalorder %s20, 0
      %p208 = por %p206, %p207
      %p209 = scmp.ne.s32.totalorder %s201, %s203
      %p210 = scmp.eq.s32.totalorder %s25, 3
      %p211 = por %p209, %p210
      %p212 = scmp.ne.s32.totalorder %s203, %s204
      %p213 = scmp.eq.s32.totalorder %s25, 0
      %p214 = por %p212, %p213
      %p215 = scmp.ne.s32.totalorder %s203, %s204
      %p216 = scmp.eq.s32.totalorder %s26, 3
      %p217 = por %p215, %p216
      %p219 = scmp.ne.s32.totalorder %s204, %s218
      %p220 = scmp.eq.s32.totalorder %s26, 0
      %p221 = por %p219, %p220
      %s222 = ssub.s32 %s20, %s27
      %p223 = scmp.eq.s32.totalorder %s222, 0
      %s225 = sadd.s32 %s224, 1
      %s226 = scalar_select %p223, %s224, %s225
      %p229 = pneg %p223
      %p230 = scmp.eq.s32.totalorder %s20, 3
      %p231 = por %p229, %p230
      %p232 = scmp.ne.s32.totalorder %s224, %s227
      %p233 = scmp.eq.s32.totalorder %s20, 0
      %p234 = por %p232, %p233
      %p235 = scmp.ne.s32.totalorder %s224, %s227
      %p236 = scmp.eq.s32.totalorder %s25, 3
      %p237 = por %p235, %p236
      %p238 = scmp.ne.s32.totalorder %s227, %s228
      %p239 = scmp.eq.s32.totalorder %s25, 0
      %p240 = por %p238, %p239
      %p241 = scmp.ne.s32.totalorder %s227, %s228
      %p242 = scmp.eq.s32.totalorder %s26, 3
      %p243 = por %p241, %p242
      %p245 = scmp.ne.s32.totalorder %s228, %s244
      %p246 = scmp.eq.s32.totalorder %s26, 0
      %p247 = por %p245, %p246
      %p248 = scmp.le.s32.totalorder 1, %s20
      %p249 = scmp.lt.s32.totalorder %s20, 5
      %p250 = pnand %p248, %p249
      %p251 = pneg %p250
      // Predicated region
      $region9: #{tpu_custom_call.1} parent=5 // pred_check
        _
      $region10: #{tpu_custom_call.1} parent=5 // pred_check_branch
        %253 = sbr.rel (%p250) target = $region12
      $region11: #{tpu_custom_call.1} parent=5 // pred_region
        %s254 = ssub.s32 %s20, 1
        // Predicated region
        $region13: #{tpu_custom_call.1} parent=11 // pred_check
          %p255 = pneg %p67
        $region14: #{tpu_custom_call.1} parent=11 // pred_check_branch
          %257 = sbr.rel (%p255) target = $region16
        $region15: #{tpu_custom_call.1} parent=11 // pred_region
          _
        $region16: #{tpu_custom_call.1} parent=11 // pred_fallthru
          _
        // Predicated region
        $region17: #{tpu_custom_call.1} parent=11 // pred_check
          %p258 = pneg %p88
        $region18: #{tpu_custom_call.1} parent=11 // pred_check_branch
          %260 = sbr.rel (%p258) target = $region20
        $region19: #{tpu_custom_call.1} parent=11 // pred_region
          _
        $region20: #{tpu_custom_call.1} parent=11 // pred_fallthru
          _
        // Predicated region
        $region21: #{tpu_custom_call.1} parent=11 // pred_check
          %p261 = pneg %p109
        $region22: #{tpu_custom_call.1} parent=11 // pred_check_branch
          %263 = sbr.rel (%p261) target = $region24
        $region23: #{tpu_custom_call.1} parent=11 // pred_region
          _
        $region24: #{tpu_custom_call.1} parent=11 // pred_fallthru
          _
        // Predicated region
        $region25: #{tpu_custom_call.1} parent=11 // pred_check
          %p264 = pneg %p130
        $region26: #{tpu_custom_call.1} parent=11 // pred_check_branch
          %266 = sbr.rel (%p264) target = $region28
        $region27: #{tpu_custom_call.1} parent=11 // pred_region
          _
        $region28: #{tpu_custom_call.1} parent=11 // pred_fallthru
          _
        // Predicated region
        $region29: #{tpu_custom_call.1} parent=11 // pred_check
          %p267 = pneg %p151
        $region30: #{tpu_custom_call.1} parent=11 // pred_check_branch
          %269 = sbr.rel (%p267) target = $region32
        $region31: #{tpu_custom_call.1} parent=11 // pred_region
          %s271 = ssub.s32 2048, 2048
          %272 = vsyncadd [#allocation3], %s271
          %s273 = sshll.u32 [#allocation2], 4
          %s274 = int_to_ptr.vmem [resolvable:$true] %s273
          %279 = dma.hbm_to_vmem [thread:$0]  %s5, 2048, %s274, [#allocation3], 128, 128, 8
        $region32: #{tpu_custom_call.1} parent=11 // pred_fallthru
          _
        // Predicated region
        $region33: #{tpu_custom_call.1} parent=11 // pred_check
          %p280 = pneg %p172
        $region34: #{tpu_custom_call.1} parent=11 // pred_check_branch
          %282 = sbr.rel (%p280) target = $region36
        $region35: #{tpu_custom_call.1} parent=11 // pred_region
          _
        $region36: #{tpu_custom_call.1} parent=11 // pred_fallthru
          _
        // Predicated region
        $region37: #{tpu_custom_call.1} parent=11 // pred_check
          %p283 = pneg %p193
        $region38: #{tpu_custom_call.1} parent=11 // pred_check_branch
          %285 = sbr.rel (%p283) target = $region40
        $region39: #{tpu_custom_call.1} parent=11 // pred_region
          %s287 = ssub.s32 2048, 2048
          %288 = vsyncadd [#allocation6], %s287
          %s289 = sshll.u32 [#allocation5], 4
          %s290 = int_to_ptr.vmem [resolvable:$true] %s289
          %295 = dma.hbm_to_vmem [thread:$0]  %s7, 2048, %s290, [#allocation6], 128, 128, 8
        $region40: #{tpu_custom_call.1} parent=11 // pred_fallthru
          _
        // Predicated region
        $region41: #{tpu_custom_call.1} parent=11 // pred_check
          %p296 = pneg %p214
        $region42: #{tpu_custom_call.1} parent=11 // pred_check_branch
          %298 = sbr.rel (%p296) target = $region44
        $region43: #{tpu_custom_call.1} parent=11 // pred_region
          _
        $region44: #{tpu_custom_call.1} parent=11 // pred_fallthru
          _
      $region12: #{tpu_custom_call.1} parent=5 // pred_fallthru
        _
      %p299 = scmp.lt.s32.totalorder %s20, 4
      // Predicated region
      $region45: #{tpu_custom_call.1} parent=5 // pred_check
        %p300 = pneg %p299
      $region46: #{tpu_custom_call.1} parent=5 // pred_check_branch
        %302 = sbr.rel (%p300) target = $region48
      $region47: #{tpu_custom_call.1} parent=5 // pred_region
        // Predicated region
        $region49: #{tpu_custom_call.1} parent=47 // pred_check
          %p303 = pneg %p40
        $region50: #{tpu_custom_call.1} parent=47 // pred_check_branch
          %305 = sbr.rel (%p303) target = $region52
        $region51: #{tpu_custom_call.1} parent=47 // pred_region
          %s306 = smul.u32 4, %s20
          %p307 = scmp.lt.s32.totalorder %s306, 15
          %s308 = scalar_select %p307, %s306, 15
          %s309 = smul.addr %s308, 8
          %s310 = scalar_lea.vmem %s0, %s309
          %s311 = smul.u32 4, %s20
        $region52: #{tpu_custom_call.1} parent=47 // pred_fallthru
          _
      $region48: #{tpu_custom_call.1} parent=5 // pred_fallthru
        _
      %p312 = scmp.le.s32.totalorder 1, %s20
      %p313 = scmp.lt.s32.totalorder %s20, 5
      %p314 = pnand %p312, %p313
      %p315 = pneg %p314
      // Predicated region
      $region53: #{tpu_custom_call.1} parent=5 // pred_check
        _
      $region54: #{tpu_custom_call.1} parent=5 // pred_check_branch
        %317 = sbr.rel (%p314) target = $region56
      $region55: #{tpu_custom_call.1} parent=5 // pred_region
        %s318 = ssub.s32 %s20, 1
        // Predicated region
        $region57: #{tpu_custom_call.1} parent=55 // pred_check
          %p319 = pneg %p151
        $region58: #{tpu_custom_call.1} parent=55 // pred_check_branch
          %321 = sbr.rel (%p319) target = $region60
        $region59: #{tpu_custom_call.1} parent=55 // pred_region
          %322 = dma.done [#allocation3], 2048
        $region60: #{tpu_custom_call.1} parent=55 // pred_fallthru
          _
        // Predicated region
        $region61: #{tpu_custom_call.1} parent=55 // pred_check
          %p323 = pneg %p193
        $region62: #{tpu_custom_call.1} parent=55 // pred_check_branch
          %325 = sbr.rel (%p323) target = $region64
        $region63: #{tpu_custom_call.1} parent=55 // pred_region
          %326 = dma.done [#allocation6], 2048
        $region64: #{tpu_custom_call.1} parent=55 // pred_fallthru
          _
        %s327 = smul.u32 4, %s25
        %p328 = scmp.lt.s32.totalorder %s327, 15
        %s329 = scalar_select %p328, %s327, 15
        %s330 = smul.addr %s329, 8
        %s331 = scalar_lea.vmem %s0, %s330
        %p332 = pneg %p46
        %p333 = pneg %p43
        %p334 = pneg %p67
        %p335 = pneg %p64
        %p336 = pneg %p88
        %p337 = pneg %p85
        %p338 = pneg %p109
        %p339 = pneg %p106
        %p340 = pneg %p130
        %p341 = pneg %p127
        %p342 = pneg %p151
        %p343 = pneg %p148
        %p344 = pneg %p172
        %p345 = pneg %p169
        %p346 = pneg %p193
        %p347 = pneg %p190
        %p348 = pneg %p214
        %p349 = pneg %p211
        %p350 = pneg %p240
        %p351 = pneg %p237
        %s352 = sand.u32 %s227, 1
        %s353 = scalar_lea.sflag [#allocation4], %s352
        %s354 = sand.u32 %s227, 1
        %s355 = smul.addr %s354, 32
        %s356 = scalar_lea.vmem [#allocation7], %s355
        %s357 = smul.u32 4, %s25
        %p358 = scmp.lt.s32.totalorder %s357, 15
        %s359 = scalar_select %p358, %s357, 15
        %s360 = smul.addr %s359, 8
        %s361 = scalar_lea.vmem %s0, %s360
        %s362 = smul.u32 4, %s25
        %s363 = smul.u32 4, %s25
        %v364 = vld [vmem:[%s361] sm:$0xff]
        %v365 = vld [vmem:[%s361 + $0x8] sm:$0xff]
        %v366 = vld [vmem:[%s361 + $0x10] sm:$0xff]
        %v367 = vld [vmem:[%s361 + $0x18] sm:$0xff]
        %v368 = vld [vmem:[%s1] sm:$0xff]
        %v369 = vld [vmem:[%s1 + $0x8] sm:$0xff]
        %v370 = vld [vmem:[%s1 + $0x10] sm:$0xff]
        %v371 = vld [vmem:[%s1 + $0x18] sm:$0xff]
        %v372 = vld [vmem:[%s2] sm:$0x1]
        %v374 = vlaneseq
        %v375 = vshrl.u32 %v374, 7
        %v376 = vsub.s32 0, %v375
        %v377 = vrot.slane %v372, %v376
        %vm379 = vcmask 261120
        %v381 = vsel %vm379, %v364, 0
        %v384 = vsel %vm379, %v365, 0
        %v387 = vsel %vm379, %v366, 0
        %v390 = vsel %vm379, %v367, 0
        %392 = vmatprep.subr.mxu0 0.0
        %393 = vmatpush1.msra.mxu0 0.0
        %394 = vmatprep.subr.mxu0 0.0
        %395 = vmatpush1.msra.mxu0 0.0
        %396 = vmatprep.subr.mxu0 0.0
        %397 = vmatpush1.msra.mxu0 0.0
        %398 = vmatprep.subr.mxu0 0.0
        %399 = vmatpush1.msra.mxu0 0.0
        %400 = vmatprep.subr.mxu0 0.0
        %401 = vmatpush1.msra.mxu0 0.0
        %402 = vmatprep.subr.mxu0 0.0
        %403 = vmatpush1.msra.mxu0 0.0
        %404 = vmatprep.subr.mxu0 0.0
        %405 = vmatpush1.msra.mxu0 0.0
        %406 = vmatprep.subr.mxu0 0.0
        %407 = vmatpush1.msra.mxu0 0.0
        %408 = vmatprep.subr.mxu0 0.0
        %409 = vmatpush1.msra.mxu0 0.0
        %410 = vmatprep.subr.mxu0 0.0
        %411 = vmatpush1.msra.mxu0 0.0
        %412 = vmatprep.subr.mxu0 0.0
        %413 = vmatpush1.msra.mxu0 0.0
        %414 = vmatprep.subr.mxu0 0.0
        %415 = vmatpush1.msra.mxu0 0.0
        %416 = vmatprep.subr.mxu0 0.0
        %417 = vmatpush1.msra.mxu0 %v371
        %418 = vmatprep.subr.mxu0 0.0
        %419 = vmatpush1.msra.mxu0 %v370
        %420 = vmatprep.subr.mxu0 0.0
        %421 = vmatpush1.msra.mxu0 %v369
        %422 = vmatprep.subr.mxu0 0.0
        %423 = vmatpush1.msra.mxu0 %v368
        %424 = vmatprep.subr.mxu0 0.0
        %425 = vmatpush2.msra.mxu0 0.0
        %426 = vmatprep.subr.mxu0 0.0
        %427 = vmatpush2.msra.mxu0 0.0
        %428 = vmatprep.subr.mxu0 0.0
        %429 = vmatpush2.msra.mxu0 0.0
        %430 = vmatprep.subr.mxu0 0.0
        %431 = vmatpush2.msra.mxu0 0.0
        %432 = vmatprep.subr.mxu0 0.0
        %433 = vmatpush2.msra.mxu0 0.0
        %434 = vmatprep.subr.mxu0 0.0
        %435 = vmatpush2.msra.mxu0 0.0
        %436 = vmatprep.subr.mxu0 0.0
        %437 = vmatpush2.msra.mxu0 0.0
        %438 = vmatprep.subr.mxu0 0.0
        %439 = vmatpush2.msra.mxu0 0.0
        %440 = vmatprep.subr.mxu0 0.0
        %441 = vmatpush2.msra.mxu0 0.0
        %442 = vmatprep.subr.mxu0 0.0
        %443 = vmatpush2.msra.mxu0 0.0
        %444 = vmatprep.subr.mxu0 0.0
        %445 = vmatpush2.msra.mxu0 0.0
        %446 = vmatprep.subr.mxu0 0.0
        %447 = vmatpush2.msra.mxu0 0.0
        %448 = vmatprep.subr.mxu0 0.0
        %449 = vmatpush2.msra.mxu0 0.0
        %450 = vmatprep.subr.mxu0 0.0
        %451 = vmatpush2.msra.mxu0 0.0
        %452 = vmatprep.subr.mxu0 0.0
        %453 = vmatpush2.msra.mxu0 0.0
        %454 = vmatprep.subr.mxu0 0.0
        %455 = vmatpush2.msra.mxu0 0.0
        %456 = vmatprep.mubr.f32.mxu0 0.0
        %457 = vmatmul.mubr.f32.gmra.mxu0 %v381
        %v458 = vpop.f32.mrf.mxu0
        %v459 = vadd.f32 %v377, %v458
        %v460 = vpop.f32.mrf.mxu0
        %461 = vmatprep.mubr.f32.mxu0 0.0
        %462 = vmatmul.mubr.f32.gmra.mxu0 %v384
        %v463 = vpop.f32.mrf.mxu0
        %v464 = vadd.f32 %v377, %v463
        %v465 = vpop.f32.mrf.mxu0
        %466 = vmatprep.mubr.f32.mxu0 0.0
        %467 = vmatmul.mubr.f32.gmra.mxu0 %v387
        %v468 = vpop.f32.mrf.mxu0
        %v469 = vadd.f32 %v377, %v468
        %v470 = vpop.f32.mrf.mxu0
        %471 = vmatprep.mubr.f32.mxu0 0.0
        %472 = vmatmul.mubr.f32.gmra.mxu0 %v390
        %v473 = vpop.f32.mrf.mxu0
        %v474 = vadd.f32 %v377, %v473
        %v475 = vpop.f32.mrf.mxu0
        %476 = vdwg.mxu0
        %v477 = vmax.f32 %v459, 0.0
        %v478 = vmax.f32 %v464, 0.0
        %v479 = vmax.f32 %v469, 0.0
        %v480 = vmax.f32 %v474, 0.0
        %v481 = vld [vmem:[%s3] sm:$0xff]
        %v482 = vld [vmem:[%s3 + $0x8] sm:$0xff]
        %v483 = vld [vmem:[%s3 + $0x10] sm:$0xff]
        %v484 = vld [vmem:[%s3 + $0x18] sm:$0xff]
        %v485 = vld [vmem:[%s3 + $0x20] sm:$0xff]
        %v486 = vld [vmem:[%s3 + $0x28] sm:$0xff]
        %v487 = vld [vmem:[%s3 + $0x30] sm:$0xff]
        %v488 = vld [vmem:[%s3 + $0x38] sm:$0xff]
        %v489 = vld [vmem:[%s3 + $0x40] sm:$0xff]
        %v490 = vld [vmem:[%s3 + $0x48] sm:$0xff]
        %v491 = vld [vmem:[%s3 + $0x50] sm:$0xff]
        %v492 = vld [vmem:[%s3 + $0x58] sm:$0xff]
        %v493 = vld [vmem:[%s3 + $0x60] sm:$0xff]
        %v494 = vld [vmem:[%s3 + $0x68] sm:$0xff]
        %v495 = vld [vmem:[%s3 + $0x70] sm:$0xff]
        %v496 = vld [vmem:[%s3 + $0x78] sm:$0xff]
        %v497 = vld [vmem:[%s4] sm:$0x1]
        %v499 = vlaneseq
        %v500 = vshrl.u32 %v499, 7
        %v501 = vsub.s32 0, %v500
        %v502 = vrot.slane %v497, %v501
        %504 = vmatprep.subr.mxu0 0.0
        %505 = vmatpush1.msra.mxu0 %v496
        %506 = vmatprep.subr.mxu0 0.0
        %507 = vmatpush1.msra.mxu0 %v495
        %508 = vmatprep.subr.mxu0 0.0
        %509 = vmatpush1.msra.mxu0 %v494
        %510 = vmatprep.subr.mxu0 0.0
        %511 = vmatpush1.msra.mxu0 %v493
        %512 = vmatprep.subr.mxu0 0.0
        %513 = vmatpush1.msra.mxu0 %v492
        %514 = vmatprep.subr.mxu0 0.0
        %515 = vmatpush1.msra.mxu0 %v491
        %516 = vmatprep.subr.mxu0 0.0
        %517 = vmatpush1.msra.mxu0 %v490
        %518 = vmatprep.subr.mxu0 0.0
        %519 = vmatpush1.msra.mxu0 %v489
        %520 = vmatprep.subr.mxu0 0.0
        %521 = vmatpush1.msra.mxu0 %v488
        %522 = vmatprep.subr.mxu0 0.0
        %523 = vmatpush1.msra.mxu0 %v487
        %524 = vmatprep.subr.mxu0 0.0
        %525 = vmatpush1.msra.mxu0 %v486
        %526 = vmatprep.subr.mxu0 0.0
        %527 = vmatpush1.msra.mxu0 %v485
        %528 = vmatprep.subr.mxu0 0.0
        %529 = vmatpush1.msra.mxu0 %v484
        %530 = vmatprep.subr.mxu0 0.0
        %531 = vmatpush1.msra.mxu0 %v483
        %532 = vmatprep.subr.mxu0 0.0
        %533 = vmatpush1.msra.mxu0 %v482
        %534 = vmatprep.subr.mxu0 0.0
        %535 = vmatpush1.msra.mxu0 %v481
        %536 = vmatprep.subr.mxu0 0.0
        %537 = vmatpush2.msra.mxu0 0.0
        %538 = vmatprep.subr.mxu0 0.0
        %539 = vmatpush2.msra.mxu0 0.0
        %540 = vmatprep.subr.mxu0 0.0
        %541 = vmatpush2.msra.mxu0 0.0
        %542 = vmatprep.subr.mxu0 0.0
        %543 = vmatpush2.msra.mxu0 0.0
        %544 = vmatprep.subr.mxu0 0.0
        %545 = vmatpush2.msra.mxu0 0.0
        %546 = vmatprep.subr.mxu0 0.0
        %547 = vmatpush2.msra.mxu0 0.0
        %548 = vmatprep.subr.mxu0 0.0
        %549 = vmatpush2.msra.mxu0 0.0
        %550 = vmatprep.subr.mxu0 0.0
        %551 = vmatpush2.msra.mxu0 0.0
        %552 = vmatprep.subr.mxu0 0.0
        %553 = vmatpush2.msra.mxu0 0.0
        %554 = vmatprep.subr.mxu0 0.0
        %555 = vmatpush2.msra.mxu0 0.0
        %556 = vmatprep.subr.mxu0 0.0
        %557 = vmatpush2.msra.mxu0 0.0
        %558 = vmatprep.subr.mxu0 0.0
        %559 = vmatpush2.msra.mxu0 0.0
        %560 = vmatprep.subr.mxu0 0.0
        %561 = vmatpush2.msra.mxu0 0.0
        %562 = vmatprep.subr.mxu0 0.0
        %563 = vmatpush2.msra.mxu0 0.0
        %564 = vmatprep.subr.mxu0 0.0
        %565 = vmatpush2.msra.mxu0 0.0
        %566 = vmatprep.subr.mxu0 0.0
        %567 = vmatpush2.msra.mxu0 0.0
        %568 = vmatprep.mubr.f32.mxu0 0.0
        %569 = vmatmul.mubr.f32.gmra.mxu0 %v477
        %v570 = vpop.f32.mrf.mxu0
        %v571 = vadd.f32 %v502, %v570
        %v572 = vpop.f32.mrf.mxu0
        %573 = vmatprep.mubr.f32.mxu0 0.0
        %574 = vmatmul.mubr.f32.gmra.mxu0 %v478
        %v575 = vpop.f32.mrf.mxu0
        %v576 = vadd.f32 %v502, %v575
        %v577 = vpop.f32.mrf.mxu0
        %578 = vmatprep.mubr.f32.mxu0 0.0
        %579 = vmatmul.mubr.f32.gmra.mxu0 %v479
        %v580 = vpop.f32.mrf.mxu0
        %v581 = vadd.f32 %v502, %v580
        %v582 = vpop.f32.mrf.mxu0
        %583 = vmatprep.mubr.f32.mxu0 0.0
        %584 = vmatmul.mubr.f32.gmra.mxu0 %v480
        %v585 = vpop.f32.mrf.mxu0
        %v586 = vadd.f32 %v502, %v585
        %v587 = vpop.f32.mrf.mxu0
        %588 = vdwg.mxu0
        %v589 = vmax.f32 %v571, 0.0
        %v590 = vmax.f32 %v576, 0.0
        %v591 = vmax.f32 %v581, 0.0
        %v592 = vmax.f32 %v586, 0.0
        %v593 = vld [vmem:[#allocation2] sm:$0xff]
        %v594 = vld [vmem:[#allocation2 + $0x8] sm:$0xff]
        %v595 = vld [vmem:[#allocation2 + $0x10] sm:$0xff]
        %v596 = vld [vmem:[#allocation2 + $0x18] sm:$0xff]
        %v597 = vld [vmem:[#allocation2 + $0x20] sm:$0xff]
        %v598 = vld [vmem:[#allocation2 + $0x28] sm:$0xff]
        %v599 = vld [vmem:[#allocation2 + $0x30] sm:$0xff]
        %v600 = vld [vmem:[#allocation2 + $0x38] sm:$0xff]
        %v601 = vld [vmem:[#allocation2 + $0x40] sm:$0xff]
        %v602 = vld [vmem:[#allocation2 + $0x48] sm:$0xff]
        %v603 = vld [vmem:[#allocation2 + $0x50] sm:$0xff]
        %v604 = vld [vmem:[#allocation2 + $0x58] sm:$0xff]
        %v605 = vld [vmem:[#allocation2 + $0x60] sm:$0xff]
        %v606 = vld [vmem:[#allocation2 + $0x68] sm:$0xff]
        %v607 = vld [vmem:[#allocation2 + $0x70] sm:$0xff]
        %v608 = vld [vmem:[#allocation2 + $0x78] sm:$0xff]
        %v609 = vld [vmem:[%s6] sm:$0x1]
        %v611 = vlaneseq
        %v612 = vshrl.u32 %v611, 7
        %v613 = vsub.s32 0, %v612
        %v614 = vrot.slane %v609, %v613
        %616 = vmatprep.subr.mxu0 0.0
        %617 = vmatpush1.msra.mxu0 %v608
        %618 = vmatprep.subr.mxu0 0.0
        %619 = vmatpush1.msra.mxu0 %v607
        %620 = vmatprep.subr.mxu0 0.0
        %621 = vmatpush1.msra.mxu0 %v606
        %622 = vmatprep.subr.mxu0 0.0
        %623 = vmatpush1.msra.mxu0 %v605
        %624 = vmatprep.subr.mxu0 0.0
        %625 = vmatpush1.msra.mxu0 %v604
        %626 = vmatprep.subr.mxu0 0.0
        %627 = vmatpush1.msra.mxu0 %v603
        %628 = vmatprep.subr.mxu0 0.0
        %629 = vmatpush1.msra.mxu0 %v602
        %630 = vmatprep.subr.mxu0 0.0
        %631 = vmatpush1.msra.mxu0 %v601
        %632 = vmatprep.subr.mxu0 0.0
        %633 = vmatpush1.msra.mxu0 %v600
        %634 = vmatprep.subr.mxu0 0.0
        %635 = vmatpush1.msra.mxu0 %v599
        %636 = vmatprep.subr.mxu0 0.0
        %637 = vmatpush1.msra.mxu0 %v598
        %638 = vmatprep.subr.mxu0 0.0
        %639 = vmatpush1.msra.mxu0 %v597
        %640 = vmatprep.subr.mxu0 0.0
        %641 = vmatpush1.msra.mxu0 %v596
        %642 = vmatprep.subr.mxu0 0.0
        %643 = vmatpush1.msra.mxu0 %v595
        %644 = vmatprep.subr.mxu0 0.0
        %645 = vmatpush1.msra.mxu0 %v594
        %646 = vmatprep.subr.mxu0 0.0
        %647 = vmatpush1.msra.mxu0 %v593
        %648 = vmatprep.subr.mxu0 0.0
        %649 = vmatpush2.msra.mxu0 0.0
        %650 = vmatprep.subr.mxu0 0.0
        %651 = vmatpush2.msra.mxu0 0.0
        %652 = vmatprep.subr.mxu0 0.0
        %653 = vmatpush2.msra.mxu0 0.0
        %654 = vmatprep.subr.mxu0 0.0
        %655 = vmatpush2.msra.mxu0 0.0
        %656 = vmatprep.subr.mxu0 0.0
        %657 = vmatpush2.msra.mxu0 0.0
        %658 = vmatprep.subr.mxu0 0.0
        %659 = vmatpush2.msra.mxu0 0.0
        %660 = vmatprep.subr.mxu0 0.0
        %661 = vmatpush2.msra.mxu0 0.0
        %662 = vmatprep.subr.mxu0 0.0
        %663 = vmatpush2.msra.mxu0 0.0
        %664 = vmatprep.subr.mxu0 0.0
        %665 = vmatpush2.msra.mxu0 0.0
        %666 = vmatprep.subr.mxu0 0.0
        %667 = vmatpush2.msra.mxu0 0.0
        %668 = vmatprep.subr.mxu0 0.0
        %669 = vmatpush2.msra.mxu0 0.0
        %670 = vmatprep.subr.mxu0 0.0
        %671 = vmatpush2.msra.mxu0 0.0
        %672 = vmatprep.subr.mxu0 0.0
        %673 = vmatpush2.msra.mxu0 0.0
        %674 = vmatprep.subr.mxu0 0.0
        %675 = vmatpush2.msra.mxu0 0.0
        %676 = vmatprep.subr.mxu0 0.0
        %677 = vmatpush2.msra.mxu0 0.0
        %678 = vmatprep.subr.mxu0 0.0
        %679 = vmatpush2.msra.mxu0 0.0
        %680 = vmatprep.mubr.f32.mxu0 0.0
        %681 = vmatmul.mubr.f32.gmra.mxu0 %v589
        %v682 = vpop.f32.mrf.mxu0
        %v683 = vadd.f32 %v614, %v682
        %v684 = vpop.f32.mrf.mxu0
        %685 = vmatprep.mubr.f32.mxu0 0.0
        %686 = vmatmul.mubr.f32.gmra.mxu0 %v590
        %v687 = vpop.f32.mrf.mxu0
        %v688 = vadd.f32 %v614, %v687
        %v689 = vpop.f32.mrf.mxu0
        %690 = vmatprep.mubr.f32.mxu0 0.0
        %691 = vmatmul.mubr.f32.gmra.mxu0 %v591
        %v692 = vpop.f32.mrf.mxu0
        %v693 = vadd.f32 %v614, %v692
        %v694 = vpop.f32.mrf.mxu0
        %695 = vmatprep.mubr.f32.mxu0 0.0
        %696 = vmatmul.mubr.f32.gmra.mxu0 %v592
        %v697 = vpop.f32.mrf.mxu0
        %v698 = vadd.f32 %v614, %v697
        %v699 = vpop.f32.mrf.mxu0
        %700 = vdwg.mxu0
        %v701 = vmax.f32 %v683, 0.0
        %v702 = vmax.f32 %v688, 0.0
        %v703 = vmax.f32 %v693, 0.0
        %v704 = vmax.f32 %v698, 0.0
        %v705 = vld [vmem:[#allocation5] sm:$0xff]
        %v706 = vld [vmem:[#allocation5 + $0x8] sm:$0xff]
        %v707 = vld [vmem:[#allocation5 + $0x10] sm:$0xff]
        %v708 = vld [vmem:[#allocation5 + $0x18] sm:$0xff]
        %v709 = vld [vmem:[#allocation5 + $0x20] sm:$0xff]
        %v710 = vld [vmem:[#allocation5 + $0x28] sm:$0xff]
        %v711 = vld [vmem:[#allocation5 + $0x30] sm:$0xff]
        %v712 = vld [vmem:[#allocation5 + $0x38] sm:$0xff]
        %v713 = vld [vmem:[#allocation5 + $0x40] sm:$0xff]
        %v714 = vld [vmem:[#allocation5 + $0x48] sm:$0xff]
        %v715 = vld [vmem:[#allocation5 + $0x50] sm:$0xff]
        %v716 = vld [vmem:[#allocation5 + $0x58] sm:$0xff]
        %v717 = vld [vmem:[#allocation5 + $0x60] sm:$0xff]
        %v718 = vld [vmem:[#allocation5 + $0x68] sm:$0xff]
        %v719 = vld [vmem:[#allocation5 + $0x70] sm:$0xff]
        %v720 = vld [vmem:[#allocation5 + $0x78] sm:$0xff]
        %v721 = vld [vmem:[%s8] sm:$0x1]
        %v723 = vlaneseq
        %v724 = vshrl.u32 %v723, 7
        %v725 = vsub.s32 0, %v724
        %v726 = vrot.slane %v721, %v725
        %728 = vmatprep.subr.mxu0 0.0
        %729 = vmatpush1.msra.mxu0 %v720
        %730 = vmatprep.subr.mxu0 0.0
        %731 = vmatpush1.msra.mxu0 %v719
        %732 = vmatprep.subr.mxu0 0.0
        %733 = vmatpush1.msra.mxu0 %v718
        %734 = vmatprep.subr.mxu0 0.0
        %735 = vmatpush1.msra.mxu0 %v717
        %736 = vmatprep.subr.mxu0 0.0
        %737 = vmatpush1.msra.mxu0 %v716
        %738 = vmatprep.subr.mxu0 0.0
        %739 = vmatpush1.msra.mxu0 %v715
        %740 = vmatprep.subr.mxu0 0.0
        %741 = vmatpush1.msra.mxu0 %v714
        %742 = vmatprep.subr.mxu0 0.0
        %743 = vmatpush1.msra.mxu0 %v713
        %744 = vmatprep.subr.mxu0 0.0
        %745 = vmatpush1.msra.mxu0 %v712
        %746 = vmatprep.subr.mxu0 0.0
        %747 = vmatpush1.msra.mxu0 %v711
        %748 = vmatprep.subr.mxu0 0.0
        %749 = vmatpush1.msra.mxu0 %v710
        %750 = vmatprep.subr.mxu0 0.0
        %751 = vmatpush1.msra.mxu0 %v709
        %752 = vmatprep.subr.mxu0 0.0
        %753 = vmatpush1.msra.mxu0 %v708
        %754 = vmatprep.subr.mxu0 0.0
        %755 = vmatpush1.msra.mxu0 %v707
        %756 = vmatprep.subr.mxu0 0.0
        %757 = vmatpush1.msra.mxu0 %v706
        %758 = vmatprep.subr.mxu0 0.0
        %759 = vmatpush1.msra.mxu0 %v705
        %760 = vmatprep.subr.mxu0 0.0
        %761 = vmatpush2.msra.mxu0 0.0
        %762 = vmatprep.subr.mxu0 0.0
        %763 = vmatpush2.msra.mxu0 0.0
        %764 = vmatprep.subr.mxu0 0.0
        %765 = vmatpush2.msra.mxu0 0.0
        %766 = vmatprep.subr.mxu0 0.0
        %767 = vmatpush2.msra.mxu0 0.0
        %768 = vmatprep.subr.mxu0 0.0
        %769 = vmatpush2.msra.mxu0 0.0
        %770 = vmatprep.subr.mxu0 0.0
        %771 = vmatpush2.msra.mxu0 0.0
        %772 = vmatprep.subr.mxu0 0.0
        %773 = vmatpush2.msra.mxu0 0.0
        %774 = vmatprep.subr.mxu0 0.0
        %775 = vmatpush2.msra.mxu0 0.0
        %776 = vmatprep.subr.mxu0 0.0
        %777 = vmatpush2.msra.mxu0 0.0
        %778 = vmatprep.subr.mxu0 0.0
        %779 = vmatpush2.msra.mxu0 0.0
        %780 = vmatprep.subr.mxu0 0.0
        %781 = vmatpush2.msra.mxu0 0.0
        %782 = vmatprep.subr.mxu0 0.0
        %783 = vmatpush2.msra.mxu0 0.0
        %784 = vmatprep.subr.mxu0 0.0
        %785 = vmatpush2.msra.mxu0 0.0
        %786 = vmatprep.subr.mxu0 0.0
        %787 = vmatpush2.msra.mxu0 0.0
        %788 = vmatprep.subr.mxu0 0.0
        %789 = vmatpush2.msra.mxu0 0.0
        %790 = vmatprep.subr.mxu0 0.0
        %791 = vmatpush2.msra.mxu0 0.0
        %792 = vmatprep.mubr.f32.mxu0 0.0
        %793 = vmatmul.mubr.f32.gmra.mxu0 %v701
        %v794 = vpop.f32.mrf.mxu0
        %v795 = vadd.f32 %v726, %v794
        %v796 = vpop.f32.mrf.mxu0
        %797 = vmatprep.mubr.f32.mxu0 0.0
        %798 = vmatmul.mubr.f32.gmra.mxu0 %v702
        %v799 = vpop.f32.mrf.mxu0
        %v800 = vadd.f32 %v726, %v799
        %v801 = vpop.f32.mrf.mxu0
        %802 = vmatprep.mubr.f32.mxu0 0.0
        %803 = vmatmul.mubr.f32.gmra.mxu0 %v703
        %v804 = vpop.f32.mrf.mxu0
        %v805 = vadd.f32 %v726, %v804
        %v806 = vpop.f32.mrf.mxu0
        %807 = vmatprep.mubr.f32.mxu0 0.0
        %808 = vmatmul.mubr.f32.gmra.mxu0 %v704
        %v809 = vpop.f32.mrf.mxu0
        %v810 = vadd.f32 %v726, %v809
        %v811 = vpop.f32.mrf.mxu0
        %812 = vdwg.mxu0
        %v813 = vlaneseq
        %v814 = vand.u32 %v813, 127
        %vm815 = vcmp.eq.s32.totalorder %v814, 0
        %vm816 = vcmp.ge.s32.totalorder %v814, 1
        %vm817 = vcmp.le.s32.totalorder %v814, 20
        %vm818 = vmand %vm816, %vm817
        %v819 = vsel %vm818, %v795, -inf
        %v820 = vsel %vm818, %v800, -inf
        %v821 = vsel %vm818, %v805, -inf
        %v822 = vsel %vm818, %v810, -inf
        %823 = vmax.xlane.f32.xlu0 %v819
        %v824 = vpop.xlane.xlu0 %823
        %825 = vmax.xlane.f32.xlu0 %v820
        %v826 = vpop.xlane.xlu0 %825
        %827 = vmax.xlane.f32.xlu0 %v821
        %v828 = vpop.xlane.xlu0 %827
        %829 = vmax.xlane.f32.xlu0 %v822
        %v830 = vpop.xlane.xlu0 %829
        %v831 = vsub.f32 0.0, %v795
        %v832 = vsub.f32 0.0, %v800
        %v833 = vsub.f32 0.0, %v805
        %v834 = vsub.f32 0.0, %v810
        %v835 = vmin.f32 %v831, 80.0
        %v836 = vmin.f32 %v832, 80.0
        %v837 = vmin.f32 %v833, 80.0
        %v838 = vmin.f32 %v834, 80.0
        %v839 = vsub.f32 %v819, %v824
        %v840 = vsub.f32 %v820, %v826
        %v841 = vsub.f32 %v821, %v828
        %v842 = vsub.f32 %v822, %v830
        %v843 = vsel %vm815, %v835, %v839
        %v844 = vsel %vm815, %v836, %v840
        %v845 = vsel %vm815, %v837, %v841
        %v846 = vsel %vm815, %v838, %v842
        %v847 = vmul.f32 %v843, 1.442695
        %v848 = vpow.pop %v847
        %v849 = vmul.f32 %v844, 1.442695
        %v850 = vpow.pop %v849
        %v851 = vmul.f32 %v845, 1.442695
        %v852 = vpow.pop %v851
        %v853 = vmul.f32 %v846, 1.442695
        %v854 = vpow.pop %v853
        %v855 = vsel %vm818, %v848, 0.0
        %v856 = vsel %vm818, %v850, 0.0
        %v857 = vsel %vm818, %v852, 0.0
        %v858 = vsel %vm818, %v854, 0.0
        %859 = vadd.xlane.f32.xlu0 %v855
        %v860 = vpop.xlane.xlu0 %859
        %861 = vadd.xlane.f32.xlu0 %v856
        %v862 = vpop.xlane.xlu0 %861
        %863 = vadd.xlane.f32.xlu0 %v857
        %v864 = vpop.xlane.xlu0 %863
        %865 = vadd.xlane.f32.xlu0 %v858
        %v866 = vpop.xlane.xlu0 %865
        %v867 = vsel %vm815, 1.0, %v848
        %v868 = vsel %vm815, 1.0, %v850
        %v869 = vsel %vm815, 1.0, %v852
        %v870 = vsel %vm815, 1.0, %v854
        %v871 = vadd.f32 %v848, 1.0
        %v872 = vadd.f32 %v850, 1.0
        %v873 = vadd.f32 %v852, 1.0
        %v874 = vadd.f32 %v854, 1.0
        %v875 = vsel %vm815, %v871, %v860
        %v876 = vsel %vm815, %v872, %v862
        %v877 = vsel %vm815, %v873, %v864
        %v878 = vsel %vm815, %v874, %v866
        %v879 = vrcp.pop %v875
        %v880 = vrcp.pop %v876
        %v881 = vrcp.pop %v877
        %v882 = vrcp.pop %v878
        %v883 = vmul.f32 %v875, %v879
        %v884 = vmul.f32 %v876, %v880
        %v885 = vmul.f32 %v877, %v881
        %v886 = vmul.f32 %v878, %v882
        %v887 = vsub.f32 2.0, %v883
        %v888 = vsub.f32 2.0, %v884
        %v889 = vsub.f32 2.0, %v885
        %v890 = vsub.f32 2.0, %v886
        %v891 = vmul.f32 %v879, %v887
        %v892 = vmul.f32 %v880, %v888
        %v893 = vmul.f32 %v881, %v889
        %v894 = vmul.f32 %v882, %v890
        %v895 = vmul.f32 %v867, %v891
        %v896 = vmul.f32 %v868, %v892
        %v897 = vmul.f32 %v869, %v893
        %v898 = vmul.f32 %v870, %v894
        %899 = vst [vmem:[%s356] sm:$0xff] %v895
        %900 = vst [vmem:[%s356 + $0x8] sm:$0xff] %v896
        %901 = vst [vmem:[%s356 + $0x10] sm:$0xff] %v897
        %902 = vst [vmem:[%s356 + $0x18] sm:$0xff] %v898
        %s903 = sand.u32 %s227, 1
        %s904 = scalar_lea.sflag [#allocation4], %s903
        %s905 = sand.u32 %s227, 1
        %s906 = smul.addr %s905, 32
        %s907 = scalar_lea.vmem [#allocation7], %s906
        // Predicated region
        $region65: #{tpu_custom_call.1} parent=55 // pred_check
          %p908 = pneg %p237
        $region66: #{tpu_custom_call.1} parent=55 // pred_check_branch
          %910 = sbr.rel (%p908) target = $region68
        $region67: #{tpu_custom_call.1} parent=55 // pred_region
          %s911 = smul.u32 4, %s25
          %s913 = ssub.s32 512, 512
          %914 = vsyncadd %s904, %s913
          %s915 = smul.addr %s911, 128
          %s916 = scalar_lea.hbm %s9, %s915
          %s917 = sshll.u32 %s907, 4
          %s918 = int_to_ptr.vmem [resolvable:$true] %s917
          %923 = dma.vmem_to_hbm [thread:$0]  %s918, 512, %s916, %s904, 128, 128, 8
        $region68: #{tpu_custom_call.1} parent=55 // pred_fallthru
          _
      $region56: #{tpu_custom_call.1} parent=5 // pred_fallthru
        _
      %p924 = scmp.le.s32.totalorder 2, %s20
      // Predicated region
      $region69: #{tpu_custom_call.1} parent=5 // pred_check
        %p925 = pneg %p924
      $region70: #{tpu_custom_call.1} parent=5 // pred_check_branch
        %927 = sbr.rel (%p925) target = $region72
      $region71: #{tpu_custom_call.1} parent=5 // pred_region
        %s928 = ssub.s32 %s20, 2
        // Predicated region
        $region73: #{tpu_custom_call.1} parent=71 // pred_check
          %p929 = pneg %p243
        $region74: #{tpu_custom_call.1} parent=71 // pred_check_branch
          %931 = sbr.rel (%p929) target = $region76
        $region75: #{tpu_custom_call.1} parent=71 // pred_region
          %s932 = sand.u32 %s228, 1
          %s933 = scalar_lea.sflag [#allocation4], %s932
          %s934 = sand.u32 %s228, 1
          %s935 = smul.addr %s934, 32
          %s936 = scalar_lea.vmem [#allocation7], %s935
          %937 = dma.done %s933, 512
        $region76: #{tpu_custom_call.1} parent=71 // pred_fallthru
          _
      $region72: #{tpu_custom_call.1} parent=5 // pred_fallthru
        _
    $region6: #{tpu_custom_call.1} parent=1 // loop_footer
      %s24 = sadd.s32 1, %s20
    $region7: #{tpu_custom_call.1} parent=1 // loop_footer_branch
      %19 = sbr.rel target = $region3
    $region8: #{tpu_custom_call.1} parent=1 // loop_exit
      _
    %938 = vsyncpa [#allocation3], 1
    %s939 = scalar_lea.sflag [#allocation3], 1
    %940 = vsyncpa %s939, 1
    %941 = vsyncpa [#allocation6], 1
    %942 = vsyncpa [#allocation4], 1
    %s943 = scalar_lea.sflag [#allocation4], 1
    %944 = vsyncpa %s943, 1

</llo_original>
